<compile_context>
chip_gen: v5e
topology: v5e:2x2
jax: 0.10.0
libtpu: 0.0.40
codegen_flags: <defaults>
</compile_context>

<pallas_src>
import jax
import jax.numpy as jnp
from jax import lax
from jax.experimental import pallas as pl
from jax.experimental.pallas import tpu as pltpu

NEG_SLOPE = 0.2      # LeakyReLU negative_slope (module default)
NEG_BIG = -1e30      # softmax mask sentinel (f32)
TILE = 128           # src/dst tile size (lane width); retune per generation


# ---------------------------------------------------------------------------
# Kernel 1: fused projection  x[N,F] @ [W_src^T | W_dst^T]  (one MXU matmul).
# ---------------------------------------------------------------------------
def proj_kernel(x_ref, w_ref, b_ref, o_ref):
    o_ref[...] = (
        jnp.dot(x_ref[...], w_ref[...], preferred_element_type=jnp.float32)
        + b_ref[...]
    )


# ---------------------------------------------------------------------------
# Kernel 2: GATv2 attention + edge-softmax + aggregation, tiled with an online
# softmax over source tiles.  Grid = (head, dst_tile, src_tile).
# ---------------------------------------------------------------------------
def gatv2_attn_kernel(fs_ref, fdt_ref, attn_ref, adj_ref, out_ref,
                      m_ref, l_ref, acc_ref):
    si = pl.program_id(2)                       # source-tile index (reduction axis)

    @pl.when(si == 0)
    def _init():
        m_ref[...] = jnp.full(m_ref.shape, NEG_BIG, jnp.float32)
        l_ref[...] = jnp.zeros(l_ref.shape, jnp.float32)
        acc_ref[...] = jnp.zeros(acc_ref.shape, jnp.float32)

    fs = fs_ref[...]            # [TS, D]  feat_src tile
    fdt = fdt_ref[...]          # [D, TD]  feat_dst tile, transposed (dst on lanes)
    attn_b = attn_ref[...]      # [D, TD]  attn[h, d] broadcast along lanes

    ts, d_dim = fs.shape
    td = fdt.shape[1]

    # GATv2 logits, lane-dense: score[u, v] = sum_d lrelu(fs[u,d] + fd[v,d]) * attn[d].
    # Loop over the small feature dim D (compile-time constant) instead of
    # materializing an [TS, TD, D] tensor with D on lanes.
    score = jnp.zeros((ts, td), jnp.float32)
    for d in range(d_dim):
        e_d = fs[:, d:d + 1] + fdt[d:d + 1, :]              # [TS, TD]
        e_d = jnp.where(e_d > 0, e_d, NEG_SLOPE * e_d)      # LeakyReLU
        score = score + e_d * attn_b[d:d + 1, :]

    # Masked online softmax over the source axis (flash-attention style).
    mask_f = adj_ref[...].astype(jnp.float32)               # int8 {0,1} -> f32
    s = jnp.where(mask_f > 0.0, score, NEG_BIG)

    m_prev = m_ref[...]                                      # [1, TD]
    m_new = jnp.maximum(m_prev, jnp.max(s, axis=0, keepdims=True))
    corr = jnp.exp(m_prev - m_new)                           # [1, TD]
    # Non-edges: exp(NEG_BIG - m_new) underflows to exactly 0 once m_new is a real
    # edge score; tiles seen before any edge accumulate finite garbage that is
    # zeroed by corr == 0 when the first real edge appears (self-loops guarantee one).
    p = jnp.exp(s - m_new)                                   # [TS, TD]
    l_ref[...] = corr * l_ref[...] + jnp.sum(p, axis=0, keepdims=True)
    # acc[d, v] += sum_u fs[u, d] * p[u, v]   (MXU, no explicit transpose)
    acc_ref[...] = corr * acc_ref[...] + lax.dot_general(
        fs, p, dimension_numbers=(((0,), (0,)), ((), ())),
        preferred_element_type=jnp.float32)                  # [D, TD]
    m_ref[...] = m_new

    @pl.when(si == pl.num_programs(2) - 1)
    def _finalize():
        # Exact normalization (finalize runs once per dst tile -- off the hot path).
        # The approx EUP reciprocal used before cost ~6e-3 abs error; exact divide
        # matches the reference to float rounding.  Guard l == 0 (padded, edge-free
        # destination columns) so no NaN is ever written.
        l = l_ref[...]
        inv_l = jnp.where(l > 0.0, 1.0 / l, 0.0)
        out_ref[...] = acc_ref[...] * inv_l


# ---------------------------------------------------------------------------
# Wrapper
# ---------------------------------------------------------------------------
def gatv2_forward(x, adj, w_src, b_src, w_dst, b_dst, attn, num_heads, out_feats):
    """x: [N, F_in]; adj: [N, N] bool (self-loops included); w_*: [H*D, F_in];
    b_*: [H*D]; attn: [1, H, D].  Returns [N, H, D] (PyTorch rst layout)."""
    N, F = x.shape
    H, D = num_heads, out_feats
    HD = H * D

    # Pad node count to a tile multiple; padded nodes have no edges and are sliced
    # off at the end.
    n_pad = ((N + TILE - 1) // TILE) * TILE
    x_p = jnp.zeros((n_pad, F), jnp.float32).at[:N].set(x.astype(jnp.float32))
    adj_p = jnp.zeros((n_pad, n_pad), jnp.int8).at[:N, :N].set(adj.astype(jnp.int8))

    # Fused projection weights: one matmul for both fc_src and fc_dst, all heads.
    w_all = jnp.concatenate([w_src.T, w_dst.T], axis=1).astype(jnp.float32)  # [F, 2HD]
    b_all = jnp.concatenate([b_src, b_dst]).reshape(1, 2 * HD).astype(jnp.float32)

    proj = pl.pallas_call(
        proj_kernel,
        out_shape=jax.ShapeDtypeStruct((n_pad, 2 * HD), jnp.float32),
        grid_spec=pltpu.PrefetchScalarGridSpec(
            num_scalar_prefetch=0,
            grid=(n_pad // TILE,),
            in_specs=[
                pl.BlockSpec((TILE, F), lambda i: (i, 0)),        # x tile
                pl.BlockSpec((F, 2 * HD), lambda i: (0, 0)),      # fused weights
                pl.BlockSpec((1, 2 * HD), lambda i: (0, 0)),      # fused bias
            ],
            out_specs=pl.BlockSpec((TILE, 2 * HD), lambda i: (i, 0)),
        ),
        compiler_params=pltpu.CompilerParams(dimension_semantics=("parallel",)),
    )(x_p, w_all, b_all)

    # Layout plumbing (XLA glue): head-major feat_src [H, N, D], transposed feat_dst
    # [H, D, N] (dst on lanes inside the kernel), attn broadcast to [H, D, TILE].
    feat_src = proj[:, :HD].reshape(n_pad, H, D).transpose(1, 0, 2)      # [H, Np, D]
    feat_dst_t = proj[:, HD:].reshape(n_pad, H, D).transpose(1, 2, 0)    # [H, D, Np]
    attn_b = jnp.broadcast_to(
        attn.reshape(H, D, 1).astype(jnp.float32), (H, D, TILE))         # [H, D, TILE]

    n_tiles = n_pad // TILE

    out = pl.pallas_call(
        gatv2_attn_kernel,
        out_shape=jax.ShapeDtypeStruct((H, D, n_pad), jnp.float32),
        grid_spec=pltpu.PrefetchScalarGridSpec(
            num_scalar_prefetch=0,
            grid=(H, n_tiles, n_tiles),                 # (head, dst_tile, src_tile)
            in_specs=[
                pl.BlockSpec((None, TILE, D), lambda h, di, si: (h, si, 0)),  # feat_src
                pl.BlockSpec((None, D, TILE), lambda h, di, si: (h, 0, di)),  # feat_dst^T
                pl.BlockSpec((None, D, TILE), lambda h, di, si: (h, 0, 0)),   # attn bcast
                pl.BlockSpec((TILE, TILE),    lambda h, di, si: (si, di)),    # adj int8
            ],
            out_specs=pl.BlockSpec((None, D, TILE), lambda h, di, si: (h, 0, di)),
            scratch_shapes=[
                pltpu.VMEM((1, TILE), jnp.float32),     # running max m
                pltpu.VMEM((1, TILE), jnp.float32),     # running denom l
                pltpu.VMEM((D, TILE), jnp.float32),     # output accumulator
            ],
        ),
        compiler_params=pltpu.CompilerParams(
            dimension_semantics=("parallel", "parallel", "arbitrary"),
            vmem_limit_bytes=32 * 1024 * 1024,
        ),
    )(feat_src, feat_dst_t, attn_b, adj_p)

    # [H, D, N] -> [N, H, D] (PyTorch rst layout); drop padded nodes.
    return out[:, :, :N].transpose(2, 0, 1)


# ---------------------------------------------------------------------------
# Pure-JAX reference mirroring the PyTorch/DGL forward.
# ---------------------------------------------------------------------------
def gatv2_reference(x, adj, w_src, b_src, w_dst, b_dst, attn, H, D):
    N, _ = x.shape
    fs = (x @ w_src.T + b_src).reshape(N, H, D)
    fd = (x @ w_dst.T + b_dst).reshape(N, H, D)
    e = fs[:, None] + fd[None, :]                       # [Ns, Nd, H, D]
    e = jnp.where(e > 0, e, NEG_SLOPE * e)
    score = (e * attn.reshape(1, 1, H, D)).sum(-1)      # [Ns, Nd, H]
    mask = adj[:, :, None]
    s = jnp.where(mask, score, -1e30)
    m = s.max(0, keepdims=True)
    p = jnp.exp(s - m) * mask
    a = p / p.sum(0, keepdims=True)
    return jnp.einsum('uvh,uhd->vhd', a, fs)            # [N, H, D]


if __name__ == "__main__":
    # Small shapes: N=16 nodes, in_feats=8, num_heads=4, out_feats=8.
    N, F_IN, H, D = 16, 8, 4, 8

    key = jax.random.PRNGKey(0)
    k = jax.random.split(key, 5)

    x = jax.random.normal(k[0], (N, F_IN), jnp.float32)

    # Deterministic parameter init (xavier_normal with gain('relu')=sqrt(2),
    # biases zero), matching reset_parameters() shapes.
    gain = 2.0 ** 0.5
    std_fc = gain * (2.0 / (F_IN + H * D)) ** 0.5
    w_src = std_fc * jax.random.normal(k[1], (H * D, F_IN), jnp.float32)
    w_dst = std_fc * jax.random.normal(k[2], (H * D, F_IN), jnp.float32)
    b_src = jnp.zeros((H * D,), jnp.float32)
    b_dst = jnp.zeros((H * D,), jnp.float32)
    std_attn = gain * (2.0 / (H * D + D)) ** 0.5
    attn = std_attn * jax.random.normal(k[3], (1, H, D), jnp.float32)

    # Sparse-ish graph with self-loops (no zero-in-degree nodes, as required by
    # the module's default allow_zero_in_degree=False).
    adj = (jax.random.uniform(k[4], (N, N)) < 0.3) | jnp.eye(N, dtype=bool)

    out = gatv2_forward(x, adj, w_src, b_src, w_dst, b_dst, attn, H, D)
    out = jax.block_until_ready(out)

    ref = gatv2_reference(x, adj, w_src, b_src, w_dst, b_dst, attn, H, D)
    assert out.shape == (N, H, D)
    err = jnp.max(jnp.abs(out - ref))
    assert jnp.allclose(out, ref, atol=1e-4, rtol=1e-4), f"max abs err = {err}"

    print("KERNEL_OK")
</pallas_src>

<mosaic_0001>
module attributes {stable_mosaic.version = 11 : i64} {
  func.func @proj_kernel(%arg0: i32, %arg1: memref<128x8xf32, #tpu.memory_space<vmem>>, %arg2: memref<8x64xf32, #tpu.memory_space<vmem>>, %arg3: memref<1x64xf32, #tpu.memory_space<vmem>>, %arg4: memref<128x64xf32, #tpu.memory_space<vmem>>) attributes {dimension_semantics = [#tpu.dimension_semantics<parallel>], iteration_bounds = array<i64: 1>, scalar_prefetch = 0 : i64, scratch_operands = 0 : i64, tpu.core_type = #tpu.core_type<tc>, window_params = [{transform_indices = @transform_0, window_bounds = array<i64: 128, 8>}, {pipeline_mode = #tpu.pipeline_mode<synchronous>, transform_indices = @transform_1, window_bounds = array<i64: 8, 64>}, {pipeline_mode = #tpu.pipeline_mode<synchronous>, transform_indices = @transform_2, window_bounds = array<i64: 1, 64>}, {transform_indices = @transform_3, window_bounds = array<i64: 128, 64>}]} {
    %c0 = arith.constant 0 : index
    %c0_0 = arith.constant 0 : index
    %0 = vector.load %arg1[%c0, %c0_0] : memref<128x8xf32, #tpu.memory_space<vmem>>, vector<128x8xf32>
    %c0_1 = arith.constant 0 : index
    %c0_2 = arith.constant 0 : index
    %1 = vector.load %arg2[%c0_1, %c0_2] : memref<8x64xf32, #tpu.memory_space<vmem>>, vector<8x64xf32>
    %cst = arith.constant dense<0.000000e+00> : vector<128x64xf32>
    %2 = tpu.matmul %0, %1, %cst {dimension_numbers = #tpu.dot_dimension_numbers<[1], [0], [0], [1], [0, 0, 1, 1], [], []>} : vector<128x8xf32>, vector<8x64xf32>, vector<128x64xf32> -> vector<128x64xf32>
    %c0_3 = arith.constant 0 : index
    %c0_4 = arith.constant 0 : index
    %3 = vector.load %arg3[%c0_3, %c0_4] : memref<1x64xf32, #tpu.memory_space<vmem>>, vector<1x64xf32>
    %4 = vector.broadcast %3 : vector<1x64xf32> to vector<128x64xf32>
    %5 = arith.addf %2, %4 : vector<128x64xf32>
    %c0_5 = arith.constant 0 : index
    %c0_6 = arith.constant 0 : index
    %6 = vector.load %arg4[%c0_5, %c0_6] : memref<128x64xf32, #tpu.memory_space<vmem>>, vector<128x64xf32>
    tpu.vector_store %arg4[%c0_5, %c0_6], %5 {strides = array<i32>} : memref<128x64xf32, #tpu.memory_space<vmem>>, vector<128x64xf32>,
    return
  }
  func.func @transform_0(%arg0: i32) -> (i32, i32) {
    %c0_i32 = arith.constant 0 : i32
    %c0_i32_0 = arith.constant 0 : i32
    return %arg0, %c0_i32 : i32, i32
  }
  func.func @transform_1(%arg0: i32) -> (i32, i32) {
    %c0_i32 = arith.constant 0 : i32
    %c0_i32_0 = arith.constant 0 : i32
    %c0_i32_1 = arith.constant 0 : i32
    return %c0_i32, %c0_i32_0 : i32, i32
  }
  func.func @transform_2(%arg0: i32) -> (i32, i32) {
    %c0_i32 = arith.constant 0 : i32
    %c0_i32_0 = arith.constant 0 : i32
    %c0_i32_1 = arith.constant 0 : i32
    return %c0_i32, %c0_i32_0 : i32, i32
  }
  func.func @transform_3(%arg0: i32) -> (i32, i32) {
    %c0_i32 = arith.constant 0 : i32
    %c0_i32_0 = arith.constant 0 : i32
    return %arg0, %c0_i32 : i32, i32
  }
}

</mosaic_0001>

<llo_original>
// kernel: tpu_custom_call.1
$region0: #{tpu_custom_call.1}
  #allocation0 [shape = 'u32[]', space=smem, size = 0x4, offset = 0x4, fixed_abs, tag = 'smem constant byte address 0x4 - core index']
  #allocation1 [shape = 'u32[72,128]{1,0:T(1,128)}', space=vmem, size = 0x9000, scoped, tag = 'internal scratch']
  %s0 = inlined_call_operand.vmem [shape: f32[128,8], index: 0, kind: input, shape index: {}]
  %s1 = inlined_call_operand.vmem [shape: f32[8,64], index: 1, kind: input, shape index: {}]
  %s2 = inlined_call_operand.vmem [shape: f32[1,64], index: 2, kind: input, shape index: {}]
  %s3 = inlined_call_operand.vmem [shape: f32[128,64], index: 3, kind: output, shape index: {}]
  %s4 = sld [smem:[#allocation0]]
  $region22: #{tpu_custom_call.1} parent=0
    _
  %s6 = ssub.s32 1, %s4
  %s7 = scalar_select 0, %s6, %s4
  // Predicated region
  $region2: #{tpu_custom_call.1} parent=0 // pred_check
    _
  $region3: #{tpu_custom_call.1} parent=0 // pred_check_branch
    %9 = sbr.rel (0) target = $region5
  $region4: #{tpu_custom_call.1} parent=0 // pred_region
    _
  $region5: #{tpu_custom_call.1} parent=0 // pred_fallthru
    _
  // Predicated region
  $region6: #{tpu_custom_call.1} parent=0 // pred_check
    _
  $region7: #{tpu_custom_call.1} parent=0 // pred_check_branch
    %11 = sbr.rel (0) target = $region9
  $region8: #{tpu_custom_call.1} parent=0 // pred_region
    _
  $region9: #{tpu_custom_call.1} parent=0 // pred_fallthru
    _
  // Predicated region
  $region10: #{tpu_custom_call.1} parent=0 // pred_check
    _
  $region11: #{tpu_custom_call.1} parent=0 // pred_check_branch
    %13 = sbr.rel (0) target = $region13
  $region12: #{tpu_custom_call.1} parent=0 // pred_region
    _
  $region13: #{tpu_custom_call.1} parent=0 // pred_fallthru
    _
  %v14 = vld [vmem:[%s0] sm:$0xff]
  %v15 = vld [vmem:[%s0 + $0x8] sm:$0xff]
  %v16 = vld [vmem:[%s0 + $0x10] sm:$0xff]
  %v17 = vld [vmem:[%s0 + $0x18] sm:$0xff]
  %v18 = vld [vmem:[%s0 + $0x20] sm:$0xff]
  %v19 = vld [vmem:[%s0 + $0x28] sm:$0xff]
  %v20 = vld [vmem:[%s0 + $0x30] sm:$0xff]
  %v21 = vld [vmem:[%s0 + $0x38] sm:$0xff]
  %v22 = vld [vmem:[%s0 + $0x40] sm:$0xff]
  %v23 = vld [vmem:[%s0 + $0x48] sm:$0xff]
  %v24 = vld [vmem:[%s0 + $0x50] sm:$0xff]
  %v25 = vld [vmem:[%s0 + $0x58] sm:$0xff]
  %v26 = vld [vmem:[%s0 + $0x60] sm:$0xff]
  %v27 = vld [vmem:[%s0 + $0x68] sm:$0xff]
  %v28 = vld [vmem:[%s0 + $0x70] sm:$0xff]
  %v29 = vld [vmem:[%s0 + $0x78] sm:$0xff]
  %v30 = vld [vmem:[%s1] sm:$0xff]
  %v31 = vld [vmem:[%s2] sm:$0x1]
  %v33 = vperm.slane %v31, 0
  %vm35 = vcmask 64512
  %v37 = vsel %vm35, %v14, 0
  %v40 = vsel %vm35, %v15, 0
  %v43 = vsel %vm35, %v16, 0
  %v46 = vsel %vm35, %v17, 0
  %v49 = vsel %vm35, %v18, 0
  %v52 = vsel %vm35, %v19, 0
  %v55 = vsel %vm35, %v20, 0
  %v58 = vsel %vm35, %v21, 0
  %v61 = vsel %vm35, %v22, 0
  %v64 = vsel %vm35, %v23, 0
  %v67 = vsel %vm35, %v24, 0
  %v70 = vsel %vm35, %v25, 0
  %v73 = vsel %vm35, %v26, 0
  %v76 = vsel %vm35, %v27, 0
  %v79 = vsel %vm35, %v28, 0
  %v82 = vsel %vm35, %v29, 0
  %84 = vmatpush.msra.mxu0 0.0
  %85 = vmatpush.msra.mxu0 0.0
  %86 = vmatpush.msra.mxu0 0.0
  %87 = vmatpush.msra.mxu0 0.0
  %88 = vmatpush.msra.mxu0 0.0
  %89 = vmatpush.msra.mxu0 0.0
  %90 = vmatpush.msra.mxu0 0.0
  %91 = vmatpush.msra.mxu0 0.0
  %92 = vmatpush.msra.mxu0 0.0
  %93 = vmatpush.msra.mxu0 0.0
  %94 = vmatpush.msra.mxu0 0.0
  %95 = vmatpush.msra.mxu0 0.0
  %96 = vmatpush.msra.mxu0 0.0
  %97 = vmatpush.msra.mxu0 0.0
  %98 = vmatpush.msra.mxu0 0.0
  %99 = vmatpush.msra.mxu0 %v30
  %100 = vmatmul.f32.gmra.mxu0 %v37
  %v101 = vpop.f32.mrf.mxu0
  %v102 = vadd.f32 %v33, %v101
  %103 = vmatmul.f32.gmra.mxu0 %v40
  %v104 = vpop.f32.mrf.mxu0
  %v105 = vadd.f32 %v33, %v104
  %106 = vmatmul.f32.gmra.mxu0 %v43
  %v107 = vpop.f32.mrf.mxu0
  %v108 = vadd.f32 %v33, %v107
  %109 = vmatmul.f32.gmra.mxu0 %v46
  %v110 = vpop.f32.mrf.mxu0
  %v111 = vadd.f32 %v33, %v110
  %112 = vmatmul.f32.gmra.mxu0 %v49
  %v113 = vpop.f32.mrf.mxu0
  %v114 = vadd.f32 %v33, %v113
  %115 = vmatmul.f32.gmra.mxu0 %v52
  %v116 = vpop.f32.mrf.mxu0
  %v117 = vadd.f32 %v33, %v116
  %118 = vmatmul.f32.gmra.mxu0 %v55
  %v119 = vpop.f32.mrf.mxu0
  %v120 = vadd.f32 %v33, %v119
  %121 = vmatmul.f32.gmra.mxu0 %v58
  %v122 = vpop.f32.mrf.mxu0
  %v123 = vadd.f32 %v33, %v122
  %124 = vmatmul.f32.gmra.mxu0 %v61
  %v125 = vpop.f32.mrf.mxu0
  %v126 = vadd.f32 %v33, %v125
  %127 = vmatmul.f32.gmra.mxu0 %v64
  %v128 = vpop.f32.mrf.mxu0
  %v129 = vadd.f32 %v33, %v128
  %130 = vmatmul.f32.gmra.mxu0 %v67
  %v131 = vpop.f32.mrf.mxu0
  %v132 = vadd.f32 %v33, %v131
  %133 = vmatmul.f32.gmra.mxu0 %v70
  %v134 = vpop.f32.mrf.mxu0
  %v135 = vadd.f32 %v33, %v134
  %136 = vmatmul.f32.gmra.mxu0 %v73
  %v137 = vpop.f32.mrf.mxu0
  %v138 = vadd.f32 %v33, %v137
  %139 = vmatmul.f32.gmra.mxu0 %v76
  %v140 = vpop.f32.mrf.mxu0
  %v141 = vadd.f32 %v33, %v140
  %142 = vmatmul.f32.gmra.mxu0 %v79
  %v143 = vpop.f32.mrf.mxu0
  %v144 = vadd.f32 %v33, %v143
  %145 = vmatmul.f32.gmra.mxu0 %v82
  %v146 = vpop.f32.mrf.mxu0
  %v147 = vadd.f32 %v33, %v146
  %148 = vdwg.mxu0
  %vm149 = vcmask 523264
  %150 = vst.msk [vmem:[%s3] sm:$0xff] %vm149, %v102
  %151 = vst.msk [vmem:[%s3 + $0x8] sm:$0xff] %vm149, %v105
  %152 = vst.msk [vmem:[%s3 + $0x10] sm:$0xff] %vm149, %v108
  %153 = vst.msk [vmem:[%s3 + $0x18] sm:$0xff] %vm149, %v111
  %154 = vst.msk [vmem:[%s3 + $0x20] sm:$0xff] %vm149, %v114
  %155 = vst.msk [vmem:[%s3 + $0x28] sm:$0xff] %vm149, %v117
  %156 = vst.msk [vmem:[%s3 + $0x30] sm:$0xff] %vm149, %v120
  %157 = vst.msk [vmem:[%s3 + $0x38] sm:$0xff] %vm149, %v123
  %158 = vst.msk [vmem:[%s3 + $0x40] sm:$0xff] %vm149, %v126
  %159 = vst.msk [vmem:[%s3 + $0x48] sm:$0xff] %vm149, %v129
  %160 = vst.msk [vmem:[%s3 + $0x50] sm:$0xff] %vm149, %v132
  %161 = vst.msk [vmem:[%s3 + $0x58] sm:$0xff] %vm149, %v135
  %162 = vst.msk [vmem:[%s3 + $0x60] sm:$0xff] %vm149, %v138
  %163 = vst.msk [vmem:[%s3 + $0x68] sm:$0xff] %vm149, %v141
  %164 = vst.msk [vmem:[%s3 + $0x70] sm:$0xff] %vm149, %v144
  %165 = vst.msk [vmem:[%s3 + $0x78] sm:$0xff] %vm149, %v147
  // Predicated region
  $region14: #{tpu_custom_call.1} parent=0 // pred_check
    _
  $region15: #{tpu_custom_call.1} parent=0 // pred_check_branch
    %167 = sbr.rel (0) target = $region17
  $region16: #{tpu_custom_call.1} parent=0 // pred_region
    _
  $region17: #{tpu_custom_call.1} parent=0 // pred_fallthru
    _
  // Predicated region
  $region18: #{tpu_custom_call.1} parent=0 // pred_check
    _
  $region19: #{tpu_custom_call.1} parent=0 // pred_check_branch
    %169 = sbr.rel (0) target = $region21
  $region20: #{tpu_custom_call.1} parent=0 // pred_region
    _
  $region21: #{tpu_custom_call.1} parent=0 // pred_fallthru
    _

</llo_original>
